<compile_context>
chip_gen: v6e
topology: v6e:2x2x1
jax: 0.10.0
libtpu: 0.0.40
codegen_flags: <defaults>
</compile_context>

<pallas_src>
import jax
import jax.numpy as jnp
from jax.experimental import pallas as pl
from jax.experimental.pallas import tpu as pltpu

SENT_DIM = 768        # LM hidden size (fixed by the module)
TKG_DIM  = 64         # tkg_embedding_dim (small synthetic)
RANK     = TKG_DIM // 2
NUM_ENT  = 256
NUM_TIME = 32
BATCH    = 8
BN_EPS   = 1e-5


# ------------------------------------------------------------------
# Single fused kernel: gathers + relation projection + score + CE loss
# ------------------------------------------------------------------
def _fused_kernel(q_ref, emb_ref, heads_ref, times_ref, ans_ref,
                  w1_ref, b1_ref, w2_ref, b2_ref,
                  g_ref, bt_ref, rm_ref, rv_ref,
                  scores_ref, loss_ref):
    f32 = jnp.float32

    # ---- embedding gathers via one-hot matmuls (MXU is otherwise idle) ----
    ent_tab  = emb_ref[0:NUM_ENT, :]                       # (N, D) == embeddings[0].weight
    time_tab = emb_ref[NUM_ENT:NUM_ENT + NUM_TIME, :]      # (T, D)
    ent_iota  = jax.lax.broadcasted_iota(jnp.int32, (BATCH, NUM_ENT), 1)
    time_iota = jax.lax.broadcasted_iota(jnp.int32, (BATCH, NUM_TIME), 1)
    head_oh = (ent_iota == heads_ref[...]).astype(f32)     # (B, N)
    time_oh = (time_iota == times_ref[...]).astype(f32)    # (B, T)
    head_e = jnp.dot(head_oh, ent_tab, preferred_element_type=f32)    # (B, D)
    time_e = jnp.dot(time_oh, time_tab, preferred_element_type=f32)   # (B, D)

    # ---- relation projection ------------------------------------------------
    h = jnp.dot(q_ref[...], w1_ref[...], preferred_element_type=f32) + b1_ref[...]
    h = jnp.dot(h, w2_ref[...], preferred_element_type=f32) + b2_ref[...]
    # BatchNorm1d in eval mode (running statistics); Dropout(0.3) -> identity.
    # TODO(synk): train-mode (batch statistics + stochastic dropout + running-stat
    # updates) is not implemented; eval-mode semantics are applied consistently.
    scale = g_ref[...] * jax.lax.rsqrt(rv_ref[...] + BN_EPS)
    rel = (h - rm_ref[...]) * scale + bt_ref[...]

    # ---- ComplEx temporal score: single MXU contraction over K = D ----------
    R = RANK
    h0, h1 = head_e[:, :R], head_e[:, R:]
    r0, r1 = rel[:, :R],    rel[:, R:]
    t0, t1 = time_e[:, :R], time_e[:, R:]
    fr0 = r0 * t0 - r1 * t1            # full_rel (real)
    fr1 = r1 * t0 + r0 * t1            # full_rel (imag)
    # lanes [real || imag] so one dot_general replaces (a @ e0.T + b @ e1.T)
    lhs = jnp.concatenate([h0 * fr0 - h1 * fr1, h1 * fr0 + h0 * fr1], axis=1)  # (B, D)
    dn = (((1,), (1,)), ((), ()))                       # contract feature axes (== @ ent.T)
    scores = jax.lax.dot_general(lhs, ent_tab, dn, preferred_element_type=f32)  # (B, N)
    scores_ref[...] = scores

    # ---- CrossEntropyLoss(reduction='mean') epilogue ------------------------
    m = jnp.max(scores, axis=1, keepdims=True)
    lse = m + jnp.log(jnp.sum(jnp.exp(scores - m), axis=1, keepdims=True))      # (B, 1)
    picked = jnp.sum(jnp.where(ent_iota == ans_ref[...], scores, 0.0),
                     axis=1, keepdims=True)                                     # (B, 1)
    loss_ref[...] = jnp.sum(lse - picked, axis=0, keepdims=True) * (1.0 / BATCH)


def fused_forward(q_emb, emb_table, heads, times, answers, p):
    B = q_emb.shape[0]
    vmem = lambda: pl.BlockSpec(memory_space=pltpu.MemorySpace.VMEM)
    scores, loss = pl.pallas_call(
        _fused_kernel,
        out_shape=(jax.ShapeDtypeStruct((B, NUM_ENT), jnp.float32),
                   jax.ShapeDtypeStruct((1, 1), jnp.float32)),
        in_specs=[vmem() for _ in range(13)],
        out_specs=(vmem(), vmem()),
    )(q_emb, emb_table,
      heads.reshape(B, 1).astype(jnp.int32),
      times.reshape(B, 1).astype(jnp.int32),
      answers.reshape(B, 1).astype(jnp.int32),
      p["w_rel"], p["b_rel"], p["w_bn"], p["b_bn"],
      p["bn_gamma"], p["bn_beta"], p["bn_rmean"], p["bn_rvar"])
    return scores, loss[0, 0]


# ------------------------------------------------------------------
# Forward (CronKGQATComplEx.forward, entity_prediction path)
# ------------------------------------------------------------------
def forward(params, q_emb, heads, times, answers):
    # TODO(synk): question_embedding normally comes from a frozen RoBERTa /
    # DistilBERT [CLS] hidden state; a synthetic (B, 768) tensor stands in.
    scores, loss = fused_forward(q_emb, params["tcomplex_embedding"],
                                 heads, times, answers, params)
    return None, scores, None, None, loss


# ------------------------------------------------------------------
# Pure-JAX reference (for a sanity check against the fused kernel)
# ------------------------------------------------------------------
def reference_forward(params, q_emb, heads, times, answers):
    emb = params["tcomplex_embedding"]
    ent_w = emb[:NUM_ENT]
    head_e = jnp.take(emb, heads, axis=0)
    time_e = jnp.take(emb, times + NUM_ENT, axis=0)

    h = q_emb @ params["w_rel"] + params["b_rel"]
    h = h @ params["w_bn"] + params["b_bn"]
    rel = ((h - params["bn_rmean"]) / jnp.sqrt(params["bn_rvar"] + BN_EPS)
           * params["bn_gamma"] + params["bn_beta"])

    R = RANK
    h0, h1 = head_e[:, :R], head_e[:, R:]
    r0, r1 = rel[:, :R], rel[:, R:]
    t0, t1 = time_e[:, :R], time_e[:, R:]
    fr0 = r0 * t0 - r1 * t1
    fr1 = r1 * t0 + r0 * t1
    scores = ((h0 * fr0 - h1 * fr1) @ ent_w[:, :R].T
              + (h1 * fr0 + h0 * fr1) @ ent_w[:, R:].T)
    lse = jax.scipy.special.logsumexp(scores, axis=1)
    picked = jnp.take_along_axis(scores, answers[:, None], axis=1)[:, 0]
    return scores, jnp.mean(lse - picked)


# ------------------------------------------------------------------
# Deterministic parameter / input construction
# ------------------------------------------------------------------
def make_params(key):
    ks = jax.random.split(key, 6)
    ent_w = 0.5 * jax.random.normal(ks[0], (NUM_ENT, TKG_DIM), jnp.float32)
    time_w = 0.5 * jax.random.normal(ks[1], (NUM_TIME, TKG_DIM), jnp.float32)
    pad = jnp.zeros((1, TKG_DIM), jnp.float32)                 # padding_idx row
    emb_table = jnp.concatenate([ent_w, time_w, pad], axis=0)  # (N + T + 1, D)

    # Linear weights stored as (in, out) so the kernel does x @ W (== x @ W_pt.T).
    w_rel = (1.0 / jnp.sqrt(SENT_DIM)) * jax.random.normal(ks[2], (SENT_DIM, TKG_DIM), jnp.float32)
    b_rel = 0.01 * jax.random.normal(ks[3], (1, TKG_DIM), jnp.float32)
    w_bn = (1.0 / jnp.sqrt(TKG_DIM)) * jax.random.normal(ks[4], (TKG_DIM, TKG_DIM), jnp.float32)
    b_bn = 0.01 * jax.random.normal(ks[5], (1, TKG_DIM), jnp.float32)

    return {
        "tcomplex_embedding": emb_table,
        "w_rel": w_rel, "b_rel": b_rel,
        "w_bn": w_bn, "b_bn": b_bn,
        "bn_gamma": jnp.ones((1, TKG_DIM), jnp.float32),
        "bn_beta": jnp.zeros((1, TKG_DIM), jnp.float32),
        "bn_rmean": jnp.zeros((1, TKG_DIM), jnp.float32),   # fresh BatchNorm1d running stats
        "bn_rvar": jnp.ones((1, TKG_DIM), jnp.float32),
    }


if __name__ == "__main__":
    key = jax.random.PRNGKey(0)
    k_params, k_q, k_h, k_t, k_a = jax.random.split(key, 5)

    params = make_params(k_params)
    q_emb = jax.random.normal(k_q, (BATCH, SENT_DIM), jnp.float32)
    heads = jax.random.randint(k_h, (BATCH,), 0, NUM_ENT, dtype=jnp.int32)
    times = jax.random.randint(k_t, (BATCH,), 0, NUM_TIME, dtype=jnp.int32)
    answers = jax.random.randint(k_a, (BATCH,), 0, NUM_ENT, dtype=jnp.int32)

    _, scores, _, _, loss = forward(params, q_emb, heads, times, answers)
    jax.block_until_ready((scores, loss))

    assert scores.shape == (BATCH, NUM_ENT)
    assert loss.shape == ()

    # sanity check against a pure-JAX reference (loose tol: MXU f32 uses bf16 passes)
    ref_scores, ref_loss = reference_forward(params, q_emb, heads, times, answers)
    assert jnp.allclose(scores, ref_scores, rtol=5e-2, atol=5e-2), "score mismatch"
    assert jnp.allclose(loss, ref_loss, rtol=5e-2, atol=5e-2), "loss mismatch"

    print("KERNEL_OK")
</pallas_src>

<mosaic_0001>
module attributes {stable_mosaic.version = 11 : i64} {
  func.func @_fused_kernel(%arg0: memref<8x768xf32, #tpu.memory_space<vmem>>, %arg1: memref<289x64xf32, #tpu.memory_space<vmem>>, %arg2: memref<8x1xi32, #tpu.memory_space<vmem>>, %arg3: memref<8x1xi32, #tpu.memory_space<vmem>>, %arg4: memref<8x1xi32, #tpu.memory_space<vmem>>, %arg5: memref<768x64xf32, #tpu.memory_space<vmem>>, %arg6: memref<1x64xf32, #tpu.memory_space<vmem>>, %arg7: memref<64x64xf32, #tpu.memory_space<vmem>>, %arg8: memref<1x64xf32, #tpu.memory_space<vmem>>, %arg9: memref<1x64xf32, #tpu.memory_space<vmem>>, %arg10: memref<1x64xf32, #tpu.memory_space<vmem>>, %arg11: memref<1x64xf32, #tpu.memory_space<vmem>>, %arg12: memref<1x64xf32, #tpu.memory_space<vmem>>, %arg13: memref<8x256xf32, #tpu.memory_space<vmem>>, %arg14: memref<1x1xf32, #tpu.memory_space<vmem>>) attributes {dimension_semantics = [], scalar_prefetch = 0 : i64, scratch_operands = 0 : i64, tpu.core_type = #tpu.core_type<tc>} {
    %c0 = arith.constant 0 : index
    %c0_0 = arith.constant 0 : index
    %0 = vector.load %arg1[%c0, %c0_0] : memref<289x64xf32, #tpu.memory_space<vmem>>, vector<256x64xf32>
    %c256 = arith.constant 256 : index
    %c0_1 = arith.constant 0 : index
    %1 = vector.load %arg1[%c256, %c0_1] : memref<289x64xf32, #tpu.memory_space<vmem>>, vector<32x64xf32>
    %2 = tpu.iota {dimensions = array<i32: 1>} : vector<8x256xi32>
    %3 = tpu.iota {dimensions = array<i32: 1>} : vector<8x32xi32>
    %c0_2 = arith.constant 0 : index
    %c0_3 = arith.constant 0 : index
    %4 = vector.load %arg2[%c0_2, %c0_3] : memref<8x1xi32, #tpu.memory_space<vmem>>, vector<8x1xi32>
    %5 = vector.broadcast %4 : vector<8x1xi32> to vector<8x256xi32>
    %6 = arith.cmpi eq, %2, %5 : vector<8x256xi32>
    %7 = arith.extui %6 : vector<8x256xi1> to vector<8x256xi32>
    %8 = arith.sitofp %7 : vector<8x256xi32> to vector<8x256xf32>
    %c0_4 = arith.constant 0 : index
    %c0_5 = arith.constant 0 : index
    %9 = vector.load %arg3[%c0_4, %c0_5] : memref<8x1xi32, #tpu.memory_space<vmem>>, vector<8x1xi32>
    %10 = vector.broadcast %9 : vector<8x1xi32> to vector<8x32xi32>
    %11 = arith.cmpi eq, %3, %10 : vector<8x32xi32>
    %12 = arith.extui %11 : vector<8x32xi1> to vector<8x32xi32>
    %13 = arith.sitofp %12 : vector<8x32xi32> to vector<8x32xf32>
    %cst = arith.constant dense<0.000000e+00> : vector<8x64xf32>
    %14 = tpu.matmul %8, %0, %cst {dimension_numbers = #tpu.dot_dimension_numbers<[1], [0], [0], [1], [0, 0, 1, 1], [], []>} : vector<8x256xf32>, vector<256x64xf32>, vector<8x64xf32> -> vector<8x64xf32>
    %cst_6 = arith.constant dense<0.000000e+00> : vector<8x64xf32>
    %15 = tpu.matmul %13, %1, %cst_6 {dimension_numbers = #tpu.dot_dimension_numbers<[1], [0], [0], [1], [0, 0, 1, 1], [], []>} : vector<8x32xf32>, vector<32x64xf32>, vector<8x64xf32> -> vector<8x64xf32>
    %c0_7 = arith.constant 0 : index
    %c0_8 = arith.constant 0 : index
    %16 = vector.load %arg0[%c0_7, %c0_8] : memref<8x768xf32, #tpu.memory_space<vmem>>, vector<8x768xf32>
    %c0_9 = arith.constant 0 : index
    %c0_10 = arith.constant 0 : index
    %17 = vector.load %arg5[%c0_9, %c0_10] : memref<768x64xf32, #tpu.memory_space<vmem>>, vector<768x64xf32>
    %cst_11 = arith.constant dense<0.000000e+00> : vector<8x64xf32>
    %18 = tpu.matmul %16, %17, %cst_11 {dimension_numbers = #tpu.dot_dimension_numbers<[1], [0], [0], [1], [0, 0, 1, 1], [], []>} : vector<8x768xf32>, vector<768x64xf32>, vector<8x64xf32> -> vector<8x64xf32>
    %c0_12 = arith.constant 0 : index
    %c0_13 = arith.constant 0 : index
    %19 = vector.load %arg6[%c0_12, %c0_13] : memref<1x64xf32, #tpu.memory_space<vmem>>, vector<1x64xf32>
    %20 = vector.broadcast %19 : vector<1x64xf32> to vector<8x64xf32>
    %21 = arith.addf %18, %20 : vector<8x64xf32>
    %c0_14 = arith.constant 0 : index
    %c0_15 = arith.constant 0 : index
    %22 = vector.load %arg7[%c0_14, %c0_15] : memref<64x64xf32, #tpu.memory_space<vmem>>, vector<64x64xf32>
    %cst_16 = arith.constant dense<0.000000e+00> : vector<8x64xf32>
    %23 = tpu.matmul %21, %22, %cst_16 {dimension_numbers = #tpu.dot_dimension_numbers<[1], [0], [0], [1], [0, 0, 1, 1], [], []>} : vector<8x64xf32>, vector<64x64xf32>, vector<8x64xf32> -> vector<8x64xf32>
    %c0_17 = arith.constant 0 : index
    %c0_18 = arith.constant 0 : index
    %24 = vector.load %arg8[%c0_17, %c0_18] : memref<1x64xf32, #tpu.memory_space<vmem>>, vector<1x64xf32>
    %25 = vector.broadcast %24 : vector<1x64xf32> to vector<8x64xf32>
    %26 = arith.addf %23, %25 : vector<8x64xf32>
    %c0_19 = arith.constant 0 : index
    %c0_20 = arith.constant 0 : index
    %27 = vector.load %arg9[%c0_19, %c0_20] : memref<1x64xf32, #tpu.memory_space<vmem>>, vector<1x64xf32>
    %c0_21 = arith.constant 0 : index
    %c0_22 = arith.constant 0 : index
    %28 = vector.load %arg12[%c0_21, %c0_22] : memref<1x64xf32, #tpu.memory_space<vmem>>, vector<1x64xf32>
    %cst_23 = arith.constant 9.99999974E-6 : f32
    %29 = vector.broadcast %cst_23 : f32 to vector<1x64xf32>
    %30 = arith.addf %28, %29 : vector<1x64xf32>
    %31 = math.rsqrt %30 : vector<1x64xf32>
    %32 = arith.mulf %27, %31 : vector<1x64xf32>
    %c0_24 = arith.constant 0 : index
    %c0_25 = arith.constant 0 : index
    %33 = vector.load %arg11[%c0_24, %c0_25] : memref<1x64xf32, #tpu.memory_space<vmem>>, vector<1x64xf32>
    %34 = vector.broadcast %33 : vector<1x64xf32> to vector<8x64xf32>
    %35 = arith.subf %26, %34 : vector<8x64xf32>
    %36 = vector.broadcast %32 : vector<1x64xf32> to vector<8x64xf32>
    %37 = arith.mulf %35, %36 : vector<8x64xf32>
    %c0_26 = arith.constant 0 : index
    %c0_27 = arith.constant 0 : index
    %38 = vector.load %arg10[%c0_26, %c0_27] : memref<1x64xf32, #tpu.memory_space<vmem>>, vector<1x64xf32>
    %39 = vector.broadcast %38 : vector<1x64xf32> to vector<8x64xf32>
    %40 = arith.addf %37, %39 : vector<8x64xf32>
    %41 = vector.extract_strided_slice %14 {offsets = [0, 0], sizes = [8, 32], strides = [1, 1]} : vector<8x64xf32> to vector<8x32xf32>
    %42 = vector.extract_strided_slice %14 {offsets = [0, 32], sizes = [8, 32], strides = [1, 1]} : vector<8x64xf32> to vector<8x32xf32>
    %43 = vector.extract_strided_slice %40 {offsets = [0, 0], sizes = [8, 32], strides = [1, 1]} : vector<8x64xf32> to vector<8x32xf32>
    %44 = vector.extract_strided_slice %40 {offsets = [0, 32], sizes = [8, 32], strides = [1, 1]} : vector<8x64xf32> to vector<8x32xf32>
    %45 = vector.extract_strided_slice %15 {offsets = [0, 0], sizes = [8, 32], strides = [1, 1]} : vector<8x64xf32> to vector<8x32xf32>
    %46 = vector.extract_strided_slice %15 {offsets = [0, 32], sizes = [8, 32], strides = [1, 1]} : vector<8x64xf32> to vector<8x32xf32>
    %47 = arith.mulf %43, %45 : vector<8x32xf32>
    %48 = arith.mulf %44, %46 : vector<8x32xf32>
    %49 = arith.subf %47, %48 : vector<8x32xf32>
    %50 = arith.mulf %44, %45 : vector<8x32xf32>
    %51 = arith.mulf %43, %46 : vector<8x32xf32>
    %52 = arith.addf %50, %51 : vector<8x32xf32>
    %53 = arith.mulf %41, %49 : vector<8x32xf32>
    %54 = arith.mulf %42, %52 : vector<8x32xf32>
    %55 = arith.subf %53, %54 : vector<8x32xf32>
    %56 = arith.mulf %42, %49 : vector<8x32xf32>
    %57 = arith.mulf %41, %52 : vector<8x32xf32>
    %58 = arith.addf %56, %57 : vector<8x32xf32>
    %59 = tpu.concatenate %55, %58 in 1 : vector<8x32xf32>, vector<8x32xf32> -> vector<8x64xf32>
    %cst_28 = arith.constant dense<0.000000e+00> : vector<8x256xf32>
    %60 = tpu.matmul %59, %0, %cst_28 {dimension_numbers = #tpu.dot_dimension_numbers<[1], [1], [0], [0], [0, 0, 1, 0], [], []>} : vector<8x64xf32>, vector<256x64xf32>, vector<8x256xf32> -> vector<8x256xf32>
    %c0_29 = arith.constant 0 : index
    %c0_30 = arith.constant 0 : index
    %61 = vector.load %arg13[%c0_29, %c0_30] : memref<8x256xf32, #tpu.memory_space<vmem>>, vector<8x256xf32>
    tpu.vector_store %arg13[%c0_29, %c0_30], %60 {strides = array<i32>} : memref<8x256xf32, #tpu.memory_space<vmem>>, vector<8x256xf32>,
    %cst_31 = arith.constant dense<0xFF800000> : vector<8xf32>
    %62 = vector.multi_reduction <maximumf>, %60, %cst_31 [1] : vector<8x256xf32> to vector<8xf32>
    %63 = vector.shape_cast %62 : vector<8xf32> to vector<8x1xf32>
    %64 = vector.broadcast %63 : vector<8x1xf32> to vector<8x256xf32>
    %65 = arith.subf %60, %64 : vector<8x256xf32>
    %66 = math.exp %65 : vector<8x256xf32>
    %cst_32 = arith.constant dense<0.000000e+00> : vector<8xf32>
    %67 = vector.multi_reduction <add>, %66, %cst_32 [1] : vector<8x256xf32> to vector<8xf32>
    %68 = vector.shape_cast %67 : vector<8xf32> to vector<8x1xf32>
    %69 = math.log %68 : vector<8x1xf32>
    %70 = arith.addf %63, %69 : vector<8x1xf32>
    %c0_33 = arith.constant 0 : index
    %c0_34 = arith.constant 0 : index
    %71 = vector.load %arg4[%c0_33, %c0_34] : memref<8x1xi32, #tpu.memory_space<vmem>>, vector<8x1xi32>
    %72 = vector.broadcast %71 : vector<8x1xi32> to vector<8x256xi32>
    %73 = arith.cmpi eq, %2, %72 : vector<8x256xi32>
    %cst_35 = arith.constant 0.000000e+00 : f32
    %74 = vector.broadcast %cst_35 : f32 to vector<8x256xf32>
    %75 = arith.select %73, %60, %74 : vector<8x256xi1>, vector<8x256xf32>
    %cst_36 = arith.constant dense<0.000000e+00> : vector<8xf32>
    %76 = vector.multi_reduction <add>, %75, %cst_36 [1] : vector<8x256xf32> to vector<8xf32>
    %77 = vector.shape_cast %76 : vector<8xf32> to vector<8x1xf32>
    %78 = arith.subf %70, %77 : vector<8x1xf32>
    %cst_37 = arith.constant dense<0.000000e+00> : vector<1xf32>
    %79 = vector.multi_reduction <add>, %78, %cst_37 [0] : vector<8x1xf32> to vector<1xf32>
    %80 = vector.shape_cast %79 : vector<1xf32> to vector<1x1xf32>
    %cst_38 = arith.constant 1.250000e-01 : f32
    %81 = vector.broadcast %cst_38 : f32 to vector<1x1xf32>
    %82 = arith.mulf %80, %81 : vector<1x1xf32>
    %c0_39 = arith.constant 0 : index
    %c0_40 = arith.constant 0 : index
    %83 = vector.load %arg14[%c0_39, %c0_40] : memref<1x1xf32, #tpu.memory_space<vmem>>, vector<1x1xf32>
    tpu.vector_store %arg14[%c0_39, %c0_40], %82 {strides = array<i32>} : memref<1x1xf32, #tpu.memory_space<vmem>>, vector<1x1xf32>,
    return
  }
}

</mosaic_0001>

<llo_original>
// kernel: tpu_custom_call.1
$region0: #{tpu_custom_call.1}
  #allocation0 [shape = 'u32[]', space=smem, size = 0x4, offset = 0x4, fixed_abs, tag = 'smem constant byte address 0x4 - core index']
  #allocation1 [shape = 'u32[144,128]{1,0:T(1,128)}', space=vmem, size = 0x12000, scoped, tag = 'internal scratch']
  %s0 = inlined_call_operand.vmem [shape: f32[8,768], index: 0, kind: input, shape index: {}]
  %s1 = inlined_call_operand.vmem [shape: f32[289,64], index: 1, kind: input, shape index: {}]
  %s2 = inlined_call_operand.vmem [shape: s32[8,1], index: 2, kind: input, shape index: {}]
  %s3 = inlined_call_operand.vmem [shape: s32[8,1], index: 3, kind: input, shape index: {}]
  %s4 = inlined_call_operand.vmem [shape: s32[8,1], index: 4, kind: input, shape index: {}]
  %s5 = inlined_call_operand.vmem [shape: f32[768,64], index: 5, kind: input, shape index: {}]
  %s6 = inlined_call_operand.vmem [shape: f32[1,64], index: 6, kind: input, shape index: {}]
  %s7 = inlined_call_operand.vmem [shape: f32[64,64], index: 7, kind: input, shape index: {}]
  %s8 = inlined_call_operand.vmem [shape: f32[1,64], index: 8, kind: input, shape index: {}]
  %s9 = inlined_call_operand.vmem [shape: f32[1,64], index: 9, kind: input, shape index: {}]
  %s10 = inlined_call_operand.vmem [shape: f32[1,64], index: 10, kind: input, shape index: {}]
  %s11 = inlined_call_operand.vmem [shape: f32[1,64], index: 11, kind: input, shape index: {}]
  %s12 = inlined_call_operand.vmem [shape: f32[1,64], index: 12, kind: input, shape index: {}]
  %s13 = inlined_call_operand.hbm [shape: f32[8,256], index: 13, kind: output, shape index: {0}]
  %s14 = inlined_call_operand.hbm [shape: f32[1,1], index: 14, kind: output, shape index: {1}]
  %15 = xla_tuple %s13, %s14
  %s16 = sld [smem:[#allocation0]]
  $region70: #{tpu_custom_call.1} parent=0
    _
  %s18 = ssub.s32 1, %s16
  %s19 = scalar_select 0, %s18, %s16
  $region1: #{tpu_custom_call.1} parent=0
    #allocation2 [shape = 'u8[8192]{0}', space=vmem, size = 0x2000, scoped, tag = 'output window, operand 0, single buffered']
    #allocation3 [shape = 's32[1]{0}', space=sflag, size = 0x4, scoped, tag = 'scoped memory for tpu_custom_call.1']
    #allocation4 [shape = 'u8[512]{0}', space=vmem, size = 0x400, scoped, tag = 'output window, operand 1, single buffered']
    #allocation5 [shape = 's32[1]{0}', space=sflag, size = 0x4, scoped, tag = 'scoped memory for tpu_custom_call.1']
    %20 = vsyncpa [#allocation3], 0
    %21 = vsyncpa [#allocation5], 0
    // Predicated region
    $region2: #{tpu_custom_call.1} parent=1 // pred_check
      _
    $region3: #{tpu_custom_call.1} parent=1 // pred_check_branch
      %23 = sbr.rel (0) target = $region5
    $region4: #{tpu_custom_call.1} parent=1 // pred_region
      _
    $region5: #{tpu_custom_call.1} parent=1 // pred_fallthru
      _
    // Predicated region
    $region6: #{tpu_custom_call.1} parent=1 // pred_check
      _
    $region7: #{tpu_custom_call.1} parent=1 // pred_check_branch
      %25 = sbr.rel (0) target = $region9
    $region8: #{tpu_custom_call.1} parent=1 // pred_region
      _
    $region9: #{tpu_custom_call.1} parent=1 // pred_fallthru
      _
    // Predicated region
    $region10: #{tpu_custom_call.1} parent=1 // pred_check
      _
    $region11: #{tpu_custom_call.1} parent=1 // pred_check_branch
      %27 = sbr.rel (0) target = $region13
    $region12: #{tpu_custom_call.1} parent=1 // pred_region
      _
    $region13: #{tpu_custom_call.1} parent=1 // pred_fallthru
      _
    // Predicated region
    $region14: #{tpu_custom_call.1} parent=1 // pred_check
      _
    $region15: #{tpu_custom_call.1} parent=1 // pred_check_branch
      %29 = sbr.rel (0) target = $region17
    $region16: #{tpu_custom_call.1} parent=1 // pred_region
      _
    $region17: #{tpu_custom_call.1} parent=1 // pred_fallthru
      _
    // Predicated region
    $region18: #{tpu_custom_call.1} parent=1 // pred_check
      _
    $region19: #{tpu_custom_call.1} parent=1 // pred_check_branch
      %31 = sbr.rel (0) target = $region21
    $region20: #{tpu_custom_call.1} parent=1 // pred_region
      _
    $region21: #{tpu_custom_call.1} parent=1 // pred_fallthru
      _
    // Predicated region
    $region22: #{tpu_custom_call.1} parent=1 // pred_check
      _
    $region23: #{tpu_custom_call.1} parent=1 // pred_check_branch
      %33 = sbr.rel (0) target = $region25
    $region24: #{tpu_custom_call.1} parent=1 // pred_region
      _
    $region25: #{tpu_custom_call.1} parent=1 // pred_fallthru
      _
    // Predicated region
    $region26: #{tpu_custom_call.1} parent=1 // pred_check
      _
    $region27: #{tpu_custom_call.1} parent=1 // pred_check_branch
      %35 = sbr.rel (0) target = $region29
    $region28: #{tpu_custom_call.1} parent=1 // pred_region
      _
    $region29: #{tpu_custom_call.1} parent=1 // pred_fallthru
      _
    // Predicated region
    $region30: #{tpu_custom_call.1} parent=1 // pred_check
      _
    $region31: #{tpu_custom_call.1} parent=1 // pred_check_branch
      %37 = sbr.rel (0) target = $region33
    $region32: #{tpu_custom_call.1} parent=1 // pred_region
      _
    $region33: #{tpu_custom_call.1} parent=1 // pred_fallthru
      _
    // Predicated region
    $region34: #{tpu_custom_call.1} parent=1 // pred_check
      _
    $region35: #{tpu_custom_call.1} parent=1 // pred_check_branch
      %39 = sbr.rel (0) target = $region37
    $region36: #{tpu_custom_call.1} parent=1 // pred_region
      _
    $region37: #{tpu_custom_call.1} parent=1 // pred_fallthru
      _
    // Predicated region
    $region38: #{tpu_custom_call.1} parent=1 // pred_check
      _
    $region39: #{tpu_custom_call.1} parent=1 // pred_check_branch
      %41 = sbr.rel (0) target = $region41
    $region40: #{tpu_custom_call.1} parent=1 // pred_region
      _
    $region41: #{tpu_custom_call.1} parent=1 // pred_fallthru
      _
    // Predicated region
    $region42: #{tpu_custom_call.1} parent=1 // pred_check
      _
    $region43: #{tpu_custom_call.1} parent=1 // pred_check_branch
      %43 = sbr.rel (0) target = $region45
    $region44: #{tpu_custom_call.1} parent=1 // pred_region
      _
    $region45: #{tpu_custom_call.1} parent=1 // pred_fallthru
      _
    // Predicated region
    $region46: #{tpu_custom_call.1} parent=1 // pred_check
      _
    $region47: #{tpu_custom_call.1} parent=1 // pred_check_branch
      %45 = sbr.rel (0) target = $region49
    $region48: #{tpu_custom_call.1} parent=1 // pred_region
      _
    $region49: #{tpu_custom_call.1} parent=1 // pred_fallthru
      _
    // Predicated region
    $region50: #{tpu_custom_call.1} parent=1 // pred_check
      _
    $region51: #{tpu_custom_call.1} parent=1 // pred_check_branch
      %47 = sbr.rel (0) target = $region53
    $region52: #{tpu_custom_call.1} parent=1 // pred_region
      _
    $region53: #{tpu_custom_call.1} parent=1 // pred_fallthru
      _
    %v48 = vld [vmem:[%s1] sm:$0xff]
    %v49 = vld [vmem:[%s1 + $0x8] sm:$0xff]
    %v50 = vld [vmem:[%s1 + $0x10] sm:$0xff]
    %v51 = vld [vmem:[%s1 + $0x18] sm:$0xff]
    %v52 = vld [vmem:[%s1 + $0x20] sm:$0xff]
    %v53 = vld [vmem:[%s1 + $0x28] sm:$0xff]
    %v54 = vld [vmem:[%s1 + $0x30] sm:$0xff]
    %v55 = vld [vmem:[%s1 + $0x38] sm:$0xff]
    %v56 = vld [vmem:[%s1 + $0x40] sm:$0xff]
    %v57 = vld [vmem:[%s1 + $0x48] sm:$0xff]
    %v58 = vld [vmem:[%s1 + $0x50] sm:$0xff]
    %v59 = vld [vmem:[%s1 + $0x58] sm:$0xff]
    %v60 = vld [vmem:[%s1 + $0x60] sm:$0xff]
    %v61 = vld [vmem:[%s1 + $0x68] sm:$0xff]
    %v62 = vld [vmem:[%s1 + $0x70] sm:$0xff]
    %v63 = vld [vmem:[%s1 + $0x78] sm:$0xff]
    %v64 = vld [vmem:[%s1 + $0x80] sm:$0xff]
    %v65 = vld [vmem:[%s1 + $0x88] sm:$0xff]
    %v66 = vld [vmem:[%s1 + $0x90] sm:$0xff]
    %v67 = vld [vmem:[%s1 + $0x98] sm:$0xff]
    %v68 = vld [vmem:[%s1 + $0xa0] sm:$0xff]
    %v69 = vld [vmem:[%s1 + $0xa8] sm:$0xff]
    %v70 = vld [vmem:[%s1 + $0xb0] sm:$0xff]
    %v71 = vld [vmem:[%s1 + $0xb8] sm:$0xff]
    %v72 = vld [vmem:[%s1 + $0xc0] sm:$0xff]
    %v73 = vld [vmem:[%s1 + $0xc8] sm:$0xff]
    %v74 = vld [vmem:[%s1 + $0xd0] sm:$0xff]
    %v75 = vld [vmem:[%s1 + $0xd8] sm:$0xff]
    %v76 = vld [vmem:[%s1 + $0xe0] sm:$0xff]
    %v77 = vld [vmem:[%s1 + $0xe8] sm:$0xff]
    %v78 = vld [vmem:[%s1 + $0xf0] sm:$0xff]
    %v79 = vld [vmem:[%s1 + $0xf8] sm:$0xff]
    %v80 = vld [vmem:[%s1 + $0x100] sm:$0xff]
    %v81 = vld [vmem:[%s1 + $0x108] sm:$0xff]
    %v82 = vld [vmem:[%s1 + $0x110] sm:$0xff]
    %v83 = vld [vmem:[%s1 + $0x118] sm:$0xff]
    %v84 = vlaneseq
    %v85 = vand.u32 %v84, 127
    %v86 = vadd.s32 %v85, 128
    %v87 = vld [vmem:[%s2] sm:$0xff]
    %88 = vset.pattern.permute.xlu0 0
    %89 = vperm.xlu0 %88, %v87
    %v90 = vpop.permute.xlu0 %89
    %vm91 = vcmp.eq.s32.totalorder %v85, %v90
    %vm92 = vcmp.eq.s32.totalorder %v86, %v90
    %v93 = vsel %vm91, 1, 0
    %v94 = vsel %vm92, 1, 0
    %v95 = vcvt.s32.f32 %v93
    %v96 = vcvt.s32.f32 %v94
    %v97 = vld [vmem:[%s3] sm:$0xff]
    %98 = vset.pattern.permute.xlu0 0
    %99 = vperm.xlu0 %98, %v97
    %v100 = vpop.permute.xlu0 %99
    %vm101 = vcmp.eq.s32.totalorder %v85, %v100
    %v102 = vsel %vm101, 1, 0
    %v103 = vcvt.s32.f32 %v102
    %104 = vmatprep.subr.mxu0 0.0
    %105 = vmatpush1.msra.mxu0 %v63
    %106 = vmatprep.subr.mxu0 0.0
    %107 = vmatpush1.msra.mxu0 %v62
    %108 = vmatprep.subr.mxu0 0.0
    %109 = vmatpush1.msra.mxu0 %v61
    %110 = vmatprep.subr.mxu0 0.0
    %111 = vmatpush1.msra.mxu0 %v60
    %112 = vmatprep.subr.mxu0 0.0
    %113 = vmatpush1.msra.mxu0 %v59
    %114 = vmatprep.subr.mxu0 0.0
    %115 = vmatpush1.msra.mxu0 %v58
    %116 = vmatprep.subr.mxu0 0.0
    %117 = vmatpush1.msra.mxu0 %v57
    %118 = vmatprep.subr.mxu0 0.0
    %119 = vmatpush1.msra.mxu0 %v56
    %120 = vmatprep.subr.mxu0 0.0
    %121 = vmatpush1.msra.mxu0 %v55
    %122 = vmatprep.subr.mxu0 0.0
    %123 = vmatpush1.msra.mxu0 %v54
    %124 = vmatprep.subr.mxu0 0.0
    %125 = vmatpush1.msra.mxu0 %v53
    %126 = vmatprep.subr.mxu0 0.0
    %127 = vmatpush1.msra.mxu0 %v52
    %128 = vmatprep.subr.mxu0 0.0
    %129 = vmatpush1.msra.mxu0 %v51
    %130 = vmatprep.subr.mxu0 0.0
    %131 = vmatpush1.msra.mxu0 %v50
    %132 = vmatprep.subr.mxu0 0.0
    %133 = vmatpush1.msra.mxu0 %v49
    %134 = vmatprep.subr.mxu0 0.0
    %135 = vmatpush1.msra.mxu0 %v48
    %136 = vmatprep.subr.mxu0 0.0
    %137 = vmatpush2.msra.mxu0 %v79
    %138 = vmatprep.subr.mxu0 0.0
    %139 = vmatpush2.msra.mxu0 %v78
    %140 = vmatprep.subr.mxu0 0.0
    %141 = vmatpush2.msra.mxu0 %v77
    %142 = vmatprep.subr.mxu0 0.0
    %143 = vmatpush2.msra.mxu0 %v76
    %144 = vmatprep.subr.mxu0 0.0
    %145 = vmatpush2.msra.mxu0 %v75
    %146 = vmatprep.subr.mxu0 0.0
    %147 = vmatpush2.msra.mxu0 %v74
    %148 = vmatprep.subr.mxu0 0.0
    %149 = vmatpush2.msra.mxu0 %v73
    %150 = vmatprep.subr.mxu0 0.0
    %151 = vmatpush2.msra.mxu0 %v72
    %152 = vmatprep.subr.mxu0 0.0
    %153 = vmatpush2.msra.mxu0 %v71
    %154 = vmatprep.subr.mxu0 0.0
    %155 = vmatpush2.msra.mxu0 %v70
    %156 = vmatprep.subr.mxu0 0.0
    %157 = vmatpush2.msra.mxu0 %v69
    %158 = vmatprep.subr.mxu0 0.0
    %159 = vmatpush2.msra.mxu0 %v68
    %160 = vmatprep.subr.mxu0 0.0
    %161 = vmatpush2.msra.mxu0 %v67
    %162 = vmatprep.subr.mxu0 0.0
    %163 = vmatpush2.msra.mxu0 %v66
    %164 = vmatprep.subr.mxu0 0.0
    %165 = vmatpush2.msra.mxu0 %v65
    %166 = vmatprep.subr.mxu0 0.0
    %167 = vmatpush2.msra.mxu0 %v64
    %168 = vmatprep.mubr.f32.mxu0 %v96
    %169 = vmatmul.mubr.f32.gmra.mxu0 %v95
    %v170 = vpop.f32.mrf.mxu0
    %v171 = vadd.f32 0.0, %v170
    %v172 = vpop.f32.mrf.mxu0
    %173 = vdwg.mxu0
    %vm174 = vcmask 261120
    %v176 = vsel %vm174, %v103, 0
    %178 = vmatprep.subr.mxu0 0.0
    %179 = vmatpush1.msra.mxu0 0.0
    %180 = vmatprep.subr.mxu0 0.0
    %181 = vmatpush1.msra.mxu0 0.0
    %182 = vmatprep.subr.mxu0 0.0
    %183 = vmatpush1.msra.mxu0 0.0
    %184 = vmatprep.subr.mxu0 0.0
    %185 = vmatpush1.msra.mxu0 0.0
    %186 = vmatprep.subr.mxu0 0.0
    %187 = vmatpush1.msra.mxu0 0.0
    %188 = vmatprep.subr.mxu0 0.0
    %189 = vmatpush1.msra.mxu0 0.0
    %190 = vmatprep.subr.mxu0 0.0
    %191 = vmatpush1.msra.mxu0 0.0
    %192 = vmatprep.subr.mxu0 0.0
    %193 = vmatpush1.msra.mxu0 0.0
    %194 = vmatprep.subr.mxu0 0.0
    %195 = vmatpush1.msra.mxu0 0.0
    %196 = vmatprep.subr.mxu0 0.0
    %197 = vmatpush1.msra.mxu0 0.0
    %198 = vmatprep.subr.mxu0 0.0
    %199 = vmatpush1.msra.mxu0 0.0
    %200 = vmatprep.subr.mxu0 0.0
    %201 = vmatpush1.msra.mxu0 0.0
    %202 = vmatprep.subr.mxu0 0.0
    %203 = vmatpush1.msra.mxu0 %v83
    %204 = vmatprep.subr.mxu0 0.0
    %205 = vmatpush1.msra.mxu0 %v82
    %206 = vmatprep.subr.mxu0 0.0
    %207 = vmatpush1.msra.mxu0 %v81
    %208 = vmatprep.subr.mxu0 0.0
    %209 = vmatpush1.msra.mxu0 %v80
    %210 = vmatprep.subr.mxu0 0.0
    %211 = vmatpush2.msra.mxu0 0.0
    %212 = vmatprep.subr.mxu0 0.0
    %213 = vmatpush2.msra.mxu0 0.0
    %214 = vmatprep.subr.mxu0 0.0
    %215 = vmatpush2.msra.mxu0 0.0
    %216 = vmatprep.subr.mxu0 0.0
    %217 = vmatpush2.msra.mxu0 0.0
    %218 = vmatprep.subr.mxu0 0.0
    %219 = vmatpush2.msra.mxu0 0.0
    %220 = vmatprep.subr.mxu0 0.0
    %221 = vmatpush2.msra.mxu0 0.0
    %222 = vmatprep.subr.mxu0 0.0
    %223 = vmatpush2.msra.mxu0 0.0
    %224 = vmatprep.subr.mxu0 0.0
    %225 = vmatpush2.msra.mxu0 0.0
    %226 = vmatprep.subr.mxu0 0.0
    %227 = vmatpush2.msra.mxu0 0.0
    %228 = vmatprep.subr.mxu0 0.0
    %229 = vmatpush2.msra.mxu0 0.0
    %230 = vmatprep.subr.mxu0 0.0
    %231 = vmatpush2.msra.mxu0 0.0
    %232 = vmatprep.subr.mxu0 0.0
    %233 = vmatpush2.msra.mxu0 0.0
    %234 = vmatprep.subr.mxu0 0.0
    %235 = vmatpush2.msra.mxu0 0.0
    %236 = vmatprep.subr.mxu0 0.0
    %237 = vmatpush2.msra.mxu0 0.0
    %238 = vmatprep.subr.mxu0 0.0
    %239 = vmatpush2.msra.mxu0 0.0
    %240 = vmatprep.subr.mxu0 0.0
    %241 = vmatpush2.msra.mxu0 0.0
    %242 = vmatprep.mubr.f32.mxu0 0.0
    %243 = vmatmul.mubr.f32.gmra.mxu0 %v176
    %v244 = vpop.f32.mrf.mxu0
    %v245 = vadd.f32 0.0, %v244
    %v246 = vpop.f32.mrf.mxu0
    %247 = vdwg.mxu0
    %v248 = vld [vmem:[%s0] sm:$0xff]
    %v249 = vld [vmem:[%s0 + $0x8] sm:$0xff]
    %v250 = vld [vmem:[%s0 + $0x10] sm:$0xff]
    %v251 = vld [vmem:[%s0 + $0x18] sm:$0xff]
    %v252 = vld [vmem:[%s0 + $0x20] sm:$0xff]
    %v253 = vld [vmem:[%s0 + $0x28] sm:$0xff]
    %v254 = vld [vmem:[%s5] sm:$0xff]
    %v255 = vld [vmem:[%s5 + $0x8] sm:$0xff]
    %v256 = vld [vmem:[%s5 + $0x10] sm:$0xff]
    %v257 = vld [vmem:[%s5 + $0x18] sm:$0xff]
    %v258 = vld [vmem:[%s5 + $0x20] sm:$0xff]
    %v259 = vld [vmem:[%s5 + $0x28] sm:$0xff]
    %v260 = vld [vmem:[%s5 + $0x30] sm:$0xff]
    %v261 = vld [vmem:[%s5 + $0x38] sm:$0xff]
    %v262 = vld [vmem:[%s5 + $0x40] sm:$0xff]
    %v263 = vld [vmem:[%s5 + $0x48] sm:$0xff]
    %v264 = vld [vmem:[%s5 + $0x50] sm:$0xff]
    %v265 = vld [vmem:[%s5 + $0x58] sm:$0xff]
    %v266 = vld [vmem:[%s5 + $0x60] sm:$0xff]
    %v267 = vld [vmem:[%s5 + $0x68] sm:$0xff]
    %v268 = vld [vmem:[%s5 + $0x70] sm:$0xff]
    %v269 = vld [vmem:[%s5 + $0x78] sm:$0xff]
    %v270 = vld [vmem:[%s5 + $0x80] sm:$0xff]
    %v271 = vld [vmem:[%s5 + $0x88] sm:$0xff]
    %v272 = vld [vmem:[%s5 + $0x90] sm:$0xff]
    %v273 = vld [vmem:[%s5 + $0x98] sm:$0xff]
    %v274 = vld [vmem:[%s5 + $0xa0] sm:$0xff]
    %v275 = vld [vmem:[%s5 + $0xa8] sm:$0xff]
    %v276 = vld [vmem:[%s5 + $0xb0] sm:$0xff]
    %v277 = vld [vmem:[%s5 + $0xb8] sm:$0xff]
    %v278 = vld [vmem:[%s5 + $0xc0] sm:$0xff]
    %v279 = vld [vmem:[%s5 + $0xc8] sm:$0xff]
    %v280 = vld [vmem:[%s5 + $0xd0] sm:$0xff]
    %v281 = vld [vmem:[%s5 + $0xd8] sm:$0xff]
    %v282 = vld [vmem:[%s5 + $0xe0] sm:$0xff]
    %v283 = vld [vmem:[%s5 + $0xe8] sm:$0xff]
    %v284 = vld [vmem:[%s5 + $0xf0] sm:$0xff]
    %v285 = vld [vmem:[%s5 + $0xf8] sm:$0xff]
    %v286 = vld [vmem:[%s5 + $0x100] sm:$0xff]
    %v287 = vld [vmem:[%s5 + $0x108] sm:$0xff]
    %v288 = vld [vmem:[%s5 + $0x110] sm:$0xff]
    %v289 = vld [vmem:[%s5 + $0x118] sm:$0xff]
    %v290 = vld [vmem:[%s5 + $0x120] sm:$0xff]
    %v291 = vld [vmem:[%s5 + $0x128] sm:$0xff]
    %v292 = vld [vmem:[%s5 + $0x130] sm:$0xff]
    %v293 = vld [vmem:[%s5 + $0x138] sm:$0xff]
    %v294 = vld [vmem:[%s5 + $0x140] sm:$0xff]
    %v295 = vld [vmem:[%s5 + $0x148] sm:$0xff]
    %v296 = vld [vmem:[%s5 + $0x150] sm:$0xff]
    %v297 = vld [vmem:[%s5 + $0x158] sm:$0xff]
    %v298 = vld [vmem:[%s5 + $0x160] sm:$0xff]
    %v299 = vld [vmem:[%s5 + $0x168] sm:$0xff]
    %v300 = vld [vmem:[%s5 + $0x170] sm:$0xff]
    %v301 = vld [vmem:[%s5 + $0x178] sm:$0xff]
    %v302 = vld [vmem:[%s5 + $0x180] sm:$0xff]
    %v303 = vld [vmem:[%s5 + $0x188] sm:$0xff]
    %v304 = vld [vmem:[%s5 + $0x190] sm:$0xff]
    %v305 = vld [vmem:[%s5 + $0x198] sm:$0xff]
    %v306 = vld [vmem:[%s5 + $0x1a0] sm:$0xff]
    %v307 = vld [vmem:[%s5 + $0x1a8] sm:$0xff]
    %v308 = vld [vmem:[%s5 + $0x1b0] sm:$0xff]
    %v309 = vld [vmem:[%s5 + $0x1b8] sm:$0xff]
    %v310 = vld [vmem:[%s5 + $0x1c0] sm:$0xff]
    %v311 = vld [vmem:[%s5 + $0x1c8] sm:$0xff]
    %v312 = vld [vmem:[%s5 + $0x1d0] sm:$0xff]
    %v313 = vld [vmem:[%s5 + $0x1d8] sm:$0xff]
    %v314 = vld [vmem:[%s5 + $0x1e0] sm:$0xff]
    %v315 = vld [vmem:[%s5 + $0x1e8] sm:$0xff]
    %v316 = vld [vmem:[%s5 + $0x1f0] sm:$0xff]
    %v317 = vld [vmem:[%s5 + $0x1f8] sm:$0xff]
    %v318 = vld [vmem:[%s5 + $0x200] sm:$0xff]
    %v319 = vld [vmem:[%s5 + $0x208] sm:$0xff]
    %v320 = vld [vmem:[%s5 + $0x210] sm:$0xff]
    %v321 = vld [vmem:[%s5 + $0x218] sm:$0xff]
    %v322 = vld [vmem:[%s5 + $0x220] sm:$0xff]
    %v323 = vld [vmem:[%s5 + $0x228] sm:$0xff]
    %v324 = vld [vmem:[%s5 + $0x230] sm:$0xff]
    %v325 = vld [vmem:[%s5 + $0x238] sm:$0xff]
    %v326 = vld [vmem:[%s5 + $0x240] sm:$0xff]
    %v327 = vld [vmem:[%s5 + $0x248] sm:$0xff]
    %v328 = vld [vmem:[%s5 + $0x250] sm:$0xff]
    %v329 = vld [vmem:[%s5 + $0x258] sm:$0xff]
    %v330 = vld [vmem:[%s5 + $0x260] sm:$0xff]
    %v331 = vld [vmem:[%s5 + $0x268] sm:$0xff]
    %v332 = vld [vmem:[%s5 + $0x270] sm:$0xff]
    %v333 = vld [vmem:[%s5 + $0x278] sm:$0xff]
    %v334 = vld [vmem:[%s5 + $0x280] sm:$0xff]
    %v335 = vld [vmem:[%s5 + $0x288] sm:$0xff]
    %v336 = vld [vmem:[%s5 + $0x290] sm:$0xff]
    %v337 = vld [vmem:[%s5 + $0x298] sm:$0xff]
    %v338 = vld [vmem:[%s5 + $0x2a0] sm:$0xff]
    %v339 = vld [vmem:[%s5 + $0x2a8] sm:$0xff]
    %v340 = vld [vmem:[%s5 + $0x2b0] sm:$0xff]
    %v341 = vld [vmem:[%s5 + $0x2b8] sm:$0xff]
    %v342 = vld [vmem:[%s5 + $0x2c0] sm:$0xff]
    %v343 = vld [vmem:[%s5 + $0x2c8] sm:$0xff]
    %v344 = vld [vmem:[%s5 + $0x2d0] sm:$0xff]
    %v345 = vld [vmem:[%s5 + $0x2d8] sm:$0xff]
    %v346 = vld [vmem:[%s5 + $0x2e0] sm:$0xff]
    %v347 = vld [vmem:[%s5 + $0x2e8] sm:$0xff]
    %v348 = vld [vmem:[%s5 + $0x2f0] sm:$0xff]
    %v349 = vld [vmem:[%s5 + $0x2f8] sm:$0xff]
    %v350 = vld [vmem:[%s6] sm:$0x1]
    %v352 = vlaneseq
    %v353 = vshrl.u32 %v352, 7
    %v354 = vsub.s32 0, %v353
    %v355 = vrot.slane %v350, %v354
    %357 = vmatprep.subr.mxu0 0.0
    %358 = vmatpush1.msra.mxu0 %v269
    %359 = vmatprep.subr.mxu0 0.0
    %360 = vmatpush1.msra.mxu0 %v268
    %361 = vmatprep.subr.mxu0 0.0
    %362 = vmatpush1.msra.mxu0 %v267
    %363 = vmatprep.subr.mxu0 0.0
    %364 = vmatpush1.msra.mxu0 %v266
    %365 = vmatprep.subr.mxu0 0.0
    %366 = vmatpush1.msra.mxu0 %v265
    %367 = vmatprep.subr.mxu0 0.0
    %368 = vmatpush1.msra.mxu0 %v264
    %369 = vmatprep.subr.mxu0 0.0
    %370 = vmatpush1.msra.mxu0 %v263
    %371 = vmatprep.subr.mxu0 0.0
    %372 = vmatpush1.msra.mxu0 %v262
    %373 = vmatprep.subr.mxu0 0.0
    %374 = vmatpush1.msra.mxu0 %v261
    %375 = vmatprep.subr.mxu0 0.0
    %376 = vmatpush1.msra.mxu0 %v260
    %377 = vmatprep.subr.mxu0 0.0
    %378 = vmatpush1.msra.mxu0 %v259
    %379 = vmatprep.subr.mxu0 0.0
    %380 = vmatpush1.msra.mxu0 %v258
    %381 = vmatprep.subr.mxu0 0.0
    %382 = vmatpush1.msra.mxu0 %v257
    %383 = vmatprep.subr.mxu0 0.0
    %384 = vmatpush1.msra.mxu0 %v256
    %385 = vmatprep.subr.mxu0 0.0
    %386 = vmatpush1.msra.mxu0 %v255
    %387 = vmatprep.subr.mxu0 0.0
    %388 = vmatpush1.msra.mxu0 %v254
    %389 = vmatprep.subr.mxu0 0.0
    %390 = vmatpush2.msra.mxu0 %v285
    %391 = vmatprep.subr.mxu0 0.0
    %392 = vmatpush2.msra.mxu0 %v284
    %393 = vmatprep.subr.mxu0 0.0
    %394 = vmatpush2.msra.mxu0 %v283
    %395 = vmatprep.subr.mxu0 0.0
    %396 = vmatpush2.msra.mxu0 %v282
    %397 = vmatprep.subr.mxu0 0.0
    %398 = vmatpush2.msra.mxu0 %v281
    %399 = vmatprep.subr.mxu0 0.0
    %400 = vmatpush2.msra.mxu0 %v280
    %401 = vmatprep.subr.mxu0 0.0
    %402 = vmatpush2.msra.mxu0 %v279
    %403 = vmatprep.subr.mxu0 0.0
    %404 = vmatpush2.msra.mxu0 %v278
    %405 = vmatprep.subr.mxu0 0.0
    %406 = vmatpush2.msra.mxu0 %v277
    %407 = vmatprep.subr.mxu0 0.0
    %408 = vmatpush2.msra.mxu0 %v276
    %409 = vmatprep.subr.mxu0 0.0
    %410 = vmatpush2.msra.mxu0 %v275
    %411 = vmatprep.subr.mxu0 0.0
    %412 = vmatpush2.msra.mxu0 %v274
    %413 = vmatprep.subr.mxu0 0.0
    %414 = vmatpush2.msra.mxu0 %v273
    %415 = vmatprep.subr.mxu0 0.0
    %416 = vmatpush2.msra.mxu0 %v272
    %417 = vmatprep.subr.mxu0 0.0
    %418 = vmatpush2.msra.mxu0 %v271
    %419 = vmatprep.subr.mxu0 0.0
    %420 = vmatpush2.msra.mxu0 %v270
    %421 = vmatprep.mubr.f32.mxu0 %v249
    %422 = vmatmul.mubr.f32.gmra.mxu0 %v248
    %v423 = vpop.f32.mrf.mxu0
    %v424 = vadd.f32 %v355, %v423
    %v425 = vpop.f32.mrf.mxu0
    %426 = vdwg.mxu0
    %427 = vmatprep.subr.mxu0 0.0
    %428 = vmatpush1.msra.mxu0 %v301
    %429 = vmatprep.subr.mxu0 0.0
    %430 = vmatpush1.msra.mxu0 %v300
    %431 = vmatprep.subr.mxu0 0.0
    %432 = vmatpush1.msra.mxu0 %v299
    %433 = vmatprep.subr.mxu0 0.0
    %434 = vmatpush1.msra.mxu0 %v298
    %435 = vmatprep.subr.mxu0 0.0
    %436 = vmatpush1.msra.mxu0 %v297
    %437 = vmatprep.subr.mxu0 0.0
    %438 = vmatpush1.msra.mxu0 %v296
    %439 = vmatprep.subr.mxu0 0.0
    %440 = vmatpush1.msra.mxu0 %v295
    %441 = vmatprep.subr.mxu0 0.0
    %442 = vmatpush1.msra.mxu0 %v294
    %443 = vmatprep.subr.mxu0 0.0
    %444 = vmatpush1.msra.mxu0 %v293
    %445 = vmatprep.subr.mxu0 0.0
    %446 = vmatpush1.msra.mxu0 %v292
    %447 = vmatprep.subr.mxu0 0.0
    %448 = vmatpush1.msra.mxu0 %v291
    %449 = vmatprep.subr.mxu0 0.0
    %450 = vmatpush1.msra.mxu0 %v290
    %451 = vmatprep.subr.mxu0 0.0
    %452 = vmatpush1.msra.mxu0 %v289
    %453 = vmatprep.subr.mxu0 0.0
    %454 = vmatpush1.msra.mxu0 %v288
    %455 = vmatprep.subr.mxu0 0.0
    %456 = vmatpush1.msra.mxu0 %v287
    %457 = vmatprep.subr.mxu0 0.0
    %458 = vmatpush1.msra.mxu0 %v286
    %459 = vmatprep.subr.mxu0 0.0
    %460 = vmatpush2.msra.mxu0 %v317
    %461 = vmatprep.subr.mxu0 0.0
    %462 = vmatpush2.msra.mxu0 %v316
    %463 = vmatprep.subr.mxu0 0.0
    %464 = vmatpush2.msra.mxu0 %v315
    %465 = vmatprep.subr.mxu0 0.0
    %466 = vmatpush2.msra.mxu0 %v314
    %467 = vmatprep.subr.mxu0 0.0
    %468 = vmatpush2.msra.mxu0 %v313
    %469 = vmatprep.subr.mxu0 0.0
    %470 = vmatpush2.msra.mxu0 %v312
    %471 = vmatprep.subr.mxu0 0.0
    %472 = vmatpush2.msra.mxu0 %v311
    %473 = vmatprep.subr.mxu0 0.0
    %474 = vmatpush2.msra.mxu0 %v310
    %475 = vmatprep.subr.mxu0 0.0
    %476 = vmatpush2.msra.mxu0 %v309
    %477 = vmatprep.subr.mxu0 0.0
    %478 = vmatpush2.msra.mxu0 %v308
    %479 = vmatprep.subr.mxu0 0.0
    %480 = vmatpush2.msra.mxu0 %v307
    %481 = vmatprep.subr.mxu0 0.0
    %482 = vmatpush2.msra.mxu0 %v306
    %483 = vmatprep.subr.mxu0 0.0
    %484 = vmatpush2.msra.mxu0 %v305
    %485 = vmatprep.subr.mxu0 0.0
    %486 = vmatpush2.msra.mxu0 %v304
    %487 = vmatprep.subr.mxu0 0.0
    %488 = vmatpush2.msra.mxu0 %v303
    %489 = vmatprep.subr.mxu0 0.0
    %490 = vmatpush2.msra.mxu0 %v302
    %491 = vmatprep.mubr.f32.mxu0 %v251
    %492 = vmatmul.mubr.f32.gmra.mxu0 %v250
    %v493 = vpop.f32.mrf.mxu0
    %v494 = vadd.f32 %v424, %v493
    %v495 = vpop.f32.mrf.mxu0
    %496 = vdwg.mxu0
    %497 = vmatprep.subr.mxu0 0.0
    %498 = vmatpush1.msra.mxu0 %v333
    %499 = vmatprep.subr.mxu0 0.0
    %500 = vmatpush1.msra.mxu0 %v332
    %501 = vmatprep.subr.mxu0 0.0
    %502 = vmatpush1.msra.mxu0 %v331
    %503 = vmatprep.subr.mxu0 0.0
    %504 = vmatpush1.msra.mxu0 %v330
    %505 = vmatprep.subr.mxu0 0.0
    %506 = vmatpush1.msra.mxu0 %v329
    %507 = vmatprep.subr.mxu0 0.0
    %508 = vmatpush1.msra.mxu0 %v328
    %509 = vmatprep.subr.mxu0 0.0
    %510 = vmatpush1.msra.mxu0 %v327
    %511 = vmatprep.subr.mxu0 0.0
    %512 = vmatpush1.msra.mxu0 %v326
    %513 = vmatprep.subr.mxu0 0.0
    %514 = vmatpush1.msra.mxu0 %v325
    %515 = vmatprep.subr.mxu0 0.0
    %516 = vmatpush1.msra.mxu0 %v324
    %517 = vmatprep.subr.mxu0 0.0
    %518 = vmatpush1.msra.mxu0 %v323
    %519 = vmatprep.subr.mxu0 0.0
    %520 = vmatpush1.msra.mxu0 %v322
    %521 = vmatprep.subr.mxu0 0.0
    %522 = vmatpush1.msra.mxu0 %v321
    %523 = vmatprep.subr.mxu0 0.0
    %524 = vmatpush1.msra.mxu0 %v320
    %525 = vmatprep.subr.mxu0 0.0
    %526 = vmatpush1.msra.mxu0 %v319
    %527 = vmatprep.subr.mxu0 0.0
    %528 = vmatpush1.msra.mxu0 %v318
    %529 = vmatprep.subr.mxu0 0.0
    %530 = vmatpush2.msra.mxu0 %v349
    %531 = vmatprep.subr.mxu0 0.0
    %532 = vmatpush2.msra.mxu0 %v348
    %533 = vmatprep.subr.mxu0 0.0
    %534 = vmatpush2.msra.mxu0 %v347
    %535 = vmatprep.subr.mxu0 0.0
    %536 = vmatpush2.msra.mxu0 %v346
    %537 = vmatprep.subr.mxu0 0.0
    %538 = vmatpush2.msra.mxu0 %v345
    %539 = vmatprep.subr.mxu0 0.0
    %540 = vmatpush2.msra.mxu0 %v344
    %541 = vmatprep.subr.mxu0 0.0
    %542 = vmatpush2.msra.mxu0 %v343
    %543 = vmatprep.subr.mxu0 0.0
    %544 = vmatpush2.msra.mxu0 %v342
    %545 = vmatprep.subr.mxu0 0.0
    %546 = vmatpush2.msra.mxu0 %v341
    %547 = vmatprep.subr.mxu0 0.0
    %548 = vmatpush2.msra.mxu0 %v340
    %549 = vmatprep.subr.mxu0 0.0
    %550 = vmatpush2.msra.mxu0 %v339
    %551 = vmatprep.subr.mxu0 0.0
    %552 = vmatpush2.msra.mxu0 %v338
    %553 = vmatprep.subr.mxu0 0.0
    %554 = vmatpush2.msra.mxu0 %v337
    %555 = vmatprep.subr.mxu0 0.0
    %556 = vmatpush2.msra.mxu0 %v336
    %557 = vmatprep.subr.mxu0 0.0
    %558 = vmatpush2.msra.mxu0 %v335
    %559 = vmatprep.subr.mxu0 0.0
    %560 = vmatpush2.msra.mxu0 %v334
    %561 = vmatprep.mubr.f32.mxu0 %v253
    %562 = vmatmul.mubr.f32.gmra.mxu0 %v252
    %v563 = vpop.f32.mrf.mxu0
    %v564 = vadd.f32 %v494, %v563
    %v565 = vpop.f32.mrf.mxu0
    %566 = vdwg.mxu0
    %v567 = vld [vmem:[%s7] sm:$0xff]
    %v568 = vld [vmem:[%s7 + $0x8] sm:$0xff]
    %v569 = vld [vmem:[%s7 + $0x10] sm:$0xff]
    %v570 = vld [vmem:[%s7 + $0x18] sm:$0xff]
    %v571 = vld [vmem:[%s7 + $0x20] sm:$0xff]
    %v572 = vld [vmem:[%s7 + $0x28] sm:$0xff]
    %v573 = vld [vmem:[%s7 + $0x30] sm:$0xff]
    %v574 = vld [vmem:[%s7 + $0x38] sm:$0xff]
    %v575 = vld [vmem:[%s8] sm:$0x1]
    %v577 = vlaneseq
    %v578 = vshrl.u32 %v577, 7
    %v579 = vsub.s32 0, %v578
    %v580 = vrot.slane %v575, %v579
    %vm582 = vcmask 523264
    %v584 = vsel %vm582, %v564, 0
    %586 = vmatprep.subr.mxu0 0.0
    %587 = vmatpush1.msra.mxu0 0.0
    %588 = vmatprep.subr.mxu0 0.0
    %589 = vmatpush1.msra.mxu0 0.0
    %590 = vmatprep.subr.mxu0 0.0
    %591 = vmatpush1.msra.mxu0 0.0
    %592 = vmatprep.subr.mxu0 0.0
    %593 = vmatpush1.msra.mxu0 0.0
    %594 = vmatprep.subr.mxu0 0.0
    %595 = vmatpush1.msra.mxu0 0.0
    %596 = vmatprep.subr.mxu0 0.0
    %597 = vmatpush1.msra.mxu0 0.0
    %598 = vmatprep.subr.mxu0 0.0
    %599 = vmatpush1.msra.mxu0 0.0
    %600 = vmatprep.subr.mxu0 0.0
    %601 = vmatpush1.msra.mxu0 0.0
    %602 = vmatprep.subr.mxu0 0.0
    %603 = vmatpush1.msra.mxu0 %v574
    %604 = vmatprep.subr.mxu0 0.0
    %605 = vmatpush1.msra.mxu0 %v573
    %606 = vmatprep.subr.mxu0 0.0
    %607 = vmatpush1.msra.mxu0 %v572
    %608 = vmatprep.subr.mxu0 0.0
    %609 = vmatpush1.msra.mxu0 %v571
    %610 = vmatprep.subr.mxu0 0.0
    %611 = vmatpush1.msra.mxu0 %v570
    %612 = vmatprep.subr.mxu0 0.0
    %613 = vmatpush1.msra.mxu0 %v569
    %614 = vmatprep.subr.mxu0 0.0
    %615 = vmatpush1.msra.mxu0 %v568
    %616 = vmatprep.subr.mxu0 0.0
    %617 = vmatpush1.msra.mxu0 %v567
    %618 = vmatprep.subr.mxu0 0.0
    %619 = vmatpush2.msra.mxu0 0.0
    %620 = vmatprep.subr.mxu0 0.0
    %621 = vmatpush2.msra.mxu0 0.0
    %622 = vmatprep.subr.mxu0 0.0
    %623 = vmatpush2.msra.mxu0 0.0
    %624 = vmatprep.subr.mxu0 0.0
    %625 = vmatpush2.msra.mxu0 0.0
    %626 = vmatprep.subr.mxu0 0.0
    %627 = vmatpush2.msra.mxu0 0.0
    %628 = vmatprep.subr.mxu0 0.0
    %629 = vmatpush2.msra.mxu0 0.0
    %630 = vmatprep.subr.mxu0 0.0
    %631 = vmatpush2.msra.mxu0 0.0
    %632 = vmatprep.subr.mxu0 0.0
    %633 = vmatpush2.msra.mxu0 0.0
    %634 = vmatprep.subr.mxu0 0.0
    %635 = vmatpush2.msra.mxu0 0.0
    %636 = vmatprep.subr.mxu0 0.0
    %637 = vmatpush2.msra.mxu0 0.0
    %638 = vmatprep.subr.mxu0 0.0
    %639 = vmatpush2.msra.mxu0 0.0
    %640 = vmatprep.subr.mxu0 0.0
    %641 = vmatpush2.msra.mxu0 0.0
    %642 = vmatprep.subr.mxu0 0.0
    %643 = vmatpush2.msra.mxu0 0.0
    %644 = vmatprep.subr.mxu0 0.0
    %645 = vmatpush2.msra.mxu0 0.0
    %646 = vmatprep.subr.mxu0 0.0
    %647 = vmatpush2.msra.mxu0 0.0
    %648 = vmatprep.subr.mxu0 0.0
    %649 = vmatpush2.msra.mxu0 0.0
    %650 = vmatprep.mubr.f32.mxu0 0.0
    %651 = vmatmul.mubr.f32.gmra.mxu0 %v584
    %v652 = vpop.f32.mrf.mxu0
    %v653 = vadd.f32 %v580, %v652
    %v654 = vpop.f32.mrf.mxu0
    %655 = vdwg.mxu0
    %v656 = vld [vmem:[%s9] sm:$0x1]
    %v657 = vld [vmem:[%s12] sm:$0x1]
    %v658 = vadd.f32 %v657, 1e-05
    %v659 = vrsqrt.pop %v658
    %v660 = vmul.f32 %v656, %v659
    %v661 = vld [vmem:[%s11] sm:$0x1]
    %v663 = vlaneseq
    %v664 = vshrl.u32 %v663, 7
    %v665 = vsub.s32 0, %v664
    %v666 = vrot.slane %v661, %v665
    %v668 = vsub.f32 %v653, %v666
    %v670 = vlaneseq
    %v671 = vshrl.u32 %v670, 7
    %v672 = vsub.s32 0, %v671
    %v673 = vrot.slane %v660, %v672
    %v675 = vmul.f32 %v668, %v673
    %v676 = vld [vmem:[%s10] sm:$0x1]
    %v678 = vlaneseq
    %v679 = vshrl.u32 %v678, 7
    %v680 = vsub.s32 0, %v679
    %v681 = vrot.slane %v676, %v680
    %v683 = vadd.f32 %v675, %v681
    %v684 = vmul.f32 %v683, %v245
    %686 = vrot.lane.b32.xlu0 %v684, 96
    %v687 = vpop.permute.xlu0 %686
    %v689 = vsub.f32 %v684, %v687
    %691 = vrot.lane.b32.xlu0 %v245, 32
    %v692 = vpop.permute.xlu0 %691
    %v694 = vmul.f32 %v683, %v692
    %695 = vrot.lane.b32.xlu0 %v245, 96
    %v696 = vpop.permute.xlu0 %695
    %v698 = vmul.f32 %v683, %v696
    %700 = vrot.lane.b32.xlu0 %v698, 32
    %v701 = vpop.permute.xlu0 %700
    %v703 = vadd.f32 %v694, %v701
    %v704 = vmul.f32 %v171, %v689
    %v705 = vmul.f32 %v171, %v703
    %707 = vrot.lane.b32.xlu0 %v705, 96
    %v708 = vpop.permute.xlu0 %707
    %v710 = vsub.f32 %v704, %v708
    %712 = vrot.lane.b32.xlu0 %v689, 32
    %v713 = vpop.permute.xlu0 %712
    %v715 = vmul.f32 %v171, %v713
    %717 = vrot.lane.b32.xlu0 %v703, 96
    %v718 = vpop.permute.xlu0 %717
    %v720 = vmul.f32 %v171, %v718
    %722 = vrot.lane.b32.xlu0 %v720, 32
    %v723 = vpop.permute.xlu0 %722
    %v725 = vadd.f32 %v715, %v723
    %v726 = vsel %vm174, %v710, %v725
    %v728 = vsel %vm582, %v726, 0
    %v731 = vsel %vm582, %v48, 0
    %v734 = vsel %vm582, %v49, 0
    %v737 = vsel %vm582, %v50, 0
    %v740 = vsel %vm582, %v51, 0
    %v743 = vsel %vm582, %v52, 0
    %v746 = vsel %vm582, %v53, 0
    %v749 = vsel %vm582, %v54, 0
    %v752 = vsel %vm582, %v55, 0
    %v755 = vsel %vm582, %v56, 0
    %v758 = vsel %vm582, %v57, 0
    %v761 = vsel %vm582, %v58, 0
    %v764 = vsel %vm582, %v59, 0
    %v767 = vsel %vm582, %v60, 0
    %v770 = vsel %vm582, %v61, 0
    %v773 = vsel %vm582, %v62, 0
    %v776 = vsel %vm582, %v63, 0
    %v779 = vsel %vm582, %v64, 0
    %v782 = vsel %vm582, %v65, 0
    %v785 = vsel %vm582, %v66, 0
    %v788 = vsel %vm582, %v67, 0
    %v791 = vsel %vm582, %v68, 0
    %v794 = vsel %vm582, %v69, 0
    %v797 = vsel %vm582, %v70, 0
    %v800 = vsel %vm582, %v71, 0
    %v803 = vsel %vm582, %v72, 0
    %v806 = vsel %vm582, %v73, 0
    %v809 = vsel %vm582, %v74, 0
    %v812 = vsel %vm582, %v75, 0
    %v815 = vsel %vm582, %v76, 0
    %v818 = vsel %vm582, %v77, 0
    %v821 = vsel %vm582, %v78, 0
    %v824 = vsel %vm582, %v79, 0
    %826 = vmatprep.subr.mxu0 0.0
    %827 = vmatpush1.xpose.msra.mxu0 %v776
    %828 = vmatprep.subr.mxu0 0.0
    %829 = vmatpush1.xpose.msra.mxu0 %v773
    %830 = vmatprep.subr.mxu0 0.0
    %831 = vmatpush1.xpose.msra.mxu0 %v770
    %832 = vmatprep.subr.mxu0 0.0
    %833 = vmatpush1.xpose.msra.mxu0 %v767
    %834 = vmatprep.subr.mxu0 0.0
    %835 = vmatpush1.xpose.msra.mxu0 %v764
    %836 = vmatprep.subr.mxu0 0.0
    %837 = vmatpush1.xpose.msra.mxu0 %v761
    %838 = vmatprep.subr.mxu0 0.0
    %839 = vmatpush1.xpose.msra.mxu0 %v758
    %840 = vmatprep.subr.mxu0 0.0
    %841 = vmatpush1.xpose.msra.mxu0 %v755
    %842 = vmatprep.subr.mxu0 0.0
    %843 = vmatpush1.xpose.msra.mxu0 %v752
    %844 = vmatprep.subr.mxu0 0.0
    %845 = vmatpush1.xpose.msra.mxu0 %v749
    %846 = vmatprep.subr.mxu0 0.0
    %847 = vmatpush1.xpose.msra.mxu0 %v746
    %848 = vmatprep.subr.mxu0 0.0
    %849 = vmatpush1.xpose.msra.mxu0 %v743
    %850 = vmatprep.subr.mxu0 0.0
    %851 = vmatpush1.xpose.msra.mxu0 %v740
    %852 = vmatprep.subr.mxu0 0.0
    %853 = vmatpush1.xpose.msra.mxu0 %v737
    %854 = vmatprep.subr.mxu0 0.0
    %855 = vmatpush1.xpose.msra.mxu0 %v734
    %856 = vmatprep.subr.mxu0 0.0
    %857 = vmatpush1.xpose.msra.mxu0 %v731
    %858 = vmatprep.subr.mxu0 0.0
    %859 = vmatpush2.xpose.msra.mxu0 %v824
    %860 = vmatprep.subr.mxu0 0.0
    %861 = vmatpush2.xpose.msra.mxu0 %v821
    %862 = vmatprep.subr.mxu0 0.0
    %863 = vmatpush2.xpose.msra.mxu0 %v818
    %864 = vmatprep.subr.mxu0 0.0
    %865 = vmatpush2.xpose.msra.mxu0 %v815
    %866 = vmatprep.subr.mxu0 0.0
    %867 = vmatpush2.xpose.msra.mxu0 %v812
    %868 = vmatprep.subr.mxu0 0.0
    %869 = vmatpush2.xpose.msra.mxu0 %v809
    %870 = vmatprep.subr.mxu0 0.0
    %871 = vmatpush2.xpose.msra.mxu0 %v806
    %872 = vmatprep.subr.mxu0 0.0
    %873 = vmatpush2.xpose.msra.mxu0 %v803
    %874 = vmatprep.subr.mxu0 0.0
    %875 = vmatpush2.xpose.msra.mxu0 %v800
    %876 = vmatprep.subr.mxu0 0.0
    %877 = vmatpush2.xpose.msra.mxu0 %v797
    %878 = vmatprep.subr.mxu0 0.0
    %879 = vmatpush2.xpose.msra.mxu0 %v794
    %880 = vmatprep.subr.mxu0 0.0
    %881 = vmatpush2.xpose.msra.mxu0 %v791
    %882 = vmatprep.subr.mxu0 0.0
    %883 = vmatpush2.xpose.msra.mxu0 %v788
    %884 = vmatprep.subr.mxu0 0.0
    %885 = vmatpush2.xpose.msra.mxu0 %v785
    %886 = vmatprep.subr.mxu0 0.0
    %887 = vmatpush2.xpose.msra.mxu0 %v782
    %888 = vmatprep.subr.mxu0 0.0
    %889 = vmatpush2.xpose.msra.mxu0 %v779
    %890 = vmatprep.mubr.f32.mxu0 0.0
    %891 = vmatmul.mubr.f32.gmra.mxu0 %v728
    %v892 = vpop.f32.mrf.mxu0
    %v893 = vadd.f32 0.0, %v892
    %v894 = vpop.f32.mrf.mxu0
    %v895 = vadd.f32 0.0, %v894
    %896 = vdwg.mxu0
    %897 = vst [vmem:[#allocation2] sm:$0xff] %v893
    %898 = vst [vmem:[#allocation2 + $0x8] sm:$0xff] %v895
    %v899 = vmax.f32 %v893, %v895
    %900 = vmax.xlane.f32.xlu0 %v899
    %v901 = vpop.xlane.xlu0 %900
    %v902 = vsub.f32 %v893, %v901
    %v903 = vsub.f32 %v895, %v901
    %v904 = vmul.f32 %v902, 1.442695
    %v905 = vpow.pop %v904
    %v906 = vmul.f32 %v903, 1.442695
    %v907 = vpow.pop %v906
    %v908 = vadd.f32 %v905, %v907
    %909 = vadd.xlane.f32.xlu0 %v908
    %v910 = vpop.xlane.xlu0 %909
    %v911 = vlog2.pop %v910
    %v912 = vmul.f32 %v911, 0.6931472
    %v913 = vadd.f32 %v901, %v912
    %v914 = vld [vmem:[%s4] sm:$0xff]
    %915 = vset.pattern.permute.xlu0 0
    %916 = vperm.xlu0 %915, %v914
    %v917 = vpop.permute.xlu0 %916
    %vm918 = vcmp.eq.s32.totalorder %v85, %v917
    %vm919 = vcmp.eq.s32.totalorder %v86, %v917
    %v920 = vsel %vm918, %v893, 0.0
    %v921 = vsel %vm919, %v895, 0.0
    %v922 = vadd.f32 %v920, %v921
    %923 = vadd.xlane.f32.xlu0 %v922
    %v924 = vpop.xlane.xlu0 %923
    %v925 = vsub.f32 %v913, %v924
    %v926 = vrot.slane %v925, 4
    %v927 = vadd.f32 %v925, %v926
    %v928 = vrot.slane %v927, 2
    %v929 = vadd.f32 %v927, %v928
    %v930 = vrot.slane %v929, 1
    %v931 = vadd.f32 %v929, %v930
    %v932 = vmul.f32 %v931, 0.125
    %vm933 = vcmask 0
    %934 = vst.msk [vmem:[#allocation4] sm:$0x1] %vm933, %v932
    // Predicated region
    $region54: #{tpu_custom_call.1} parent=1 // pred_check
      _
    $region55: #{tpu_custom_call.1} parent=1 // pred_check_branch
      %936 = sbr.rel (0) target = $region57
    $region56: #{tpu_custom_call.1} parent=1 // pred_region
      %s938 = ssub.s32 256, 256
      %939 = vsyncadd [#allocation3], %s938
      %s941 = sshll.u32 [#allocation2], 4
      %s942 = int_to_ptr.vmem [resolvable:$true] %s941
      %944 = dma.vmem_to_hbm [thread:$0]  %s942, 256, %s13, [#allocation3]
    $region57: #{tpu_custom_call.1} parent=1 // pred_fallthru
      _
    // Predicated region
    $region58: #{tpu_custom_call.1} parent=1 // pred_check
      _
    $region59: #{tpu_custom_call.1} parent=1 // pred_check_branch
      %946 = sbr.rel (0) target = $region61
    $region60: #{tpu_custom_call.1} parent=1 // pred_region
      %s948 = ssub.s32 16, 16
      %949 = vsyncadd [#allocation5], %s948
      %s951 = sshll.u32 [#allocation4], 4
      %s952 = int_to_ptr.vmem [resolvable:$true] %s951
      %954 = dma.vmem_to_hbm [thread:$0]  %s952, 16, %s14, [#allocation5]
    $region61: #{tpu_custom_call.1} parent=1 // pred_fallthru
      _
    // Predicated region
    $region62: #{tpu_custom_call.1} parent=1 // pred_check
      _
    $region63: #{tpu_custom_call.1} parent=1 // pred_check_branch
      %956 = sbr.rel (0) target = $region65
    $region64: #{tpu_custom_call.1} parent=1 // pred_region
      %957 = dma.done [#allocation3], 256
    $region65: #{tpu_custom_call.1} parent=1 // pred_fallthru
      _
    // Predicated region
    $region66: #{tpu_custom_call.1} parent=1 // pred_check
      _
    $region67: #{tpu_custom_call.1} parent=1 // pred_check_branch
      %959 = sbr.rel (0) target = $region69
    $region68: #{tpu_custom_call.1} parent=1 // pred_region
      %960 = dma.done [#allocation5], 16
    $region69: #{tpu_custom_call.1} parent=1 // pred_fallthru
      _
    %961 = vsyncpa [#allocation3], 1
    %962 = vsyncpa [#allocation5], 1

</llo_original>
